<compile_context>
chip_gen: v7x
topology: tpu7x:2x2x1
jax: 0.10.0
libtpu: 0.0.40
codegen_flags: <defaults>
</compile_context>

<pallas_src>
import jax
import jax.numpy as jnp
from jax.experimental import pallas as pl
from jax.experimental.pallas import tpu as pltpu


def _elementwise_kernel(x_ref, o_ref):
    # Exact PyTorch op sequence: x = x + 1; x = x * 2; x = x - 3
    x = x_ref[...]
    o_ref[...] = (x + 1) * 2 - 3


def _sublane_multiple(dtype):
    # 8 rows for 4-byte, 16 for 2-byte, 32 for 1-byte dtypes (sublane packing).
    return max(8, 32 // jnp.dtype(dtype).itemsize)


def _tile_bytes_budget():
    # Per-buffer tile budget: 2 arrays x 2 pipeline buffers must stay within
    # the scoped-VMEM default (16 MiB on v5e, 32 MiB on v6e/v7x).
    try:
        kind = jax.devices()[0].device_kind.lower()
    except Exception:
        kind = ""
    if "v5" in kind:
        return 2 << 20   # 4 x 2 MiB = 8 MiB  (v5e 16 MiB scoped default)
    return 4 << 20       # 4 x 4 MiB = 16 MiB (v6e/v7x 32 MiB scoped default)


def _choose_row_tile(n_rows, lanes, dtype):
    itemsize = jnp.dtype(dtype).itemsize
    sub = _sublane_multiple(dtype)
    budget = _tile_bytes_budget()
    max_rows = max(sub, (budget // (lanes * itemsize)) // sub * sub)
    if n_rows <= max_rows:
        # Single block == whole array: one grid step, zero pipeline overhead.
        return n_rows
    # Partial last block (if any) is handled by Pallas' masked output writes;
    # elementwise op, so correctness is unaffected.
    return max_rows


@jax.jit
def pt_module_forward(x):
    orig_shape = x.shape
    dtype = x.dtype
    flat = x.reshape(-1)
    total = flat.shape[0]

    if total < 128:
        # Too small for a lane-dense tile; fused jnp is cheaper than a kernel.
        return ((x + 1) * 2) - 3

    # Widest lane-dense view that divides the element count (wider rows ->
    # fewer, larger DMA descriptors).  Falls back to 128 + a jnp tail.
    lanes = next((l for l in (1024, 512, 256, 128) if total % l == 0), 128)
    main = (total // lanes) * lanes
    n_rows = main // lanes
    row_tile = _choose_row_tile(n_rows, lanes, dtype)

    x2d = flat[:main].reshape(n_rows, lanes)

    out2d = pl.pallas_call(
        _elementwise_kernel,
        out_shape=jax.ShapeDtypeStruct((n_rows, lanes), dtype),
        grid=(pl.cdiv(n_rows, row_tile),),
        in_specs=[pl.BlockSpec((row_tile, lanes), lambda i: (i, 0))],
        out_specs=pl.BlockSpec((row_tile, lanes), lambda i: (i, 0)),
        compiler_params=pltpu.CompilerParams(
            dimension_semantics=("parallel",),
        ),
    )(x2d)

    out_flat = out2d.reshape(-1)
    if main != total:
        # <=127-element ragged tail: plain jnp, fused under jit (no pad/slice
        # extra passes over the whole tensor).
        tail_out = ((flat[main:] + 1) * 2) - 3
        out_flat = jnp.concatenate([out_flat, tail_out])
    return out_flat.reshape(orig_shape)


if __name__ == "__main__":
    key = jax.random.PRNGKey(0)
    x = jax.random.normal(key, (2, 4, 16, 16), dtype=jnp.float32)

    # Reference matching the PyTorch forward exactly.
    ref = ((x + 1.0) * 2.0) - 3.0

    out = pt_module_forward(x)
    out = jax.block_until_ready(out)

    assert out.shape == x.shape, "shape mismatch"
    assert jnp.allclose(out, ref, atol=1e-6, rtol=1e-6), "mismatch vs reference"

    print("KERNEL_OK")
</pallas_src>

<mosaic_0001>
module attributes {stable_mosaic.version = 11 : i64} {
  func.func @_elementwise_kernel(%arg0: i32, %arg1: memref<2x1024xf32, #tpu.memory_space<vmem>>, %arg2: memref<2x1024xf32, #tpu.memory_space<vmem>>) attributes {dimension_semantics = [#tpu.dimension_semantics<parallel>], iteration_bounds = array<i64: 1>, scalar_prefetch = 0 : i64, scratch_operands = 0 : i64, tpu.core_type = #tpu.core_type<tc>, window_params = [{transform_indices = @transform_0, window_bounds = array<i64: 2, 1024>}, {transform_indices = @transform_1, window_bounds = array<i64: 2, 1024>}]} {
    %c0 = arith.constant 0 : index
    %c0_0 = arith.constant 0 : index
    %0 = vector.load %arg1[%c0, %c0_0] : memref<2x1024xf32, #tpu.memory_space<vmem>>, vector<2x1024xf32>
    %cst = arith.constant 1.000000e+00 : f32
    %1 = vector.broadcast %cst : f32 to vector<2x1024xf32>
    %2 = arith.addf %0, %1 : vector<2x1024xf32>
    %cst_1 = arith.constant 2.000000e+00 : f32
    %3 = vector.broadcast %cst_1 : f32 to vector<2x1024xf32>
    %4 = arith.mulf %2, %3 : vector<2x1024xf32>
    %cst_2 = arith.constant 3.000000e+00 : f32
    %5 = vector.broadcast %cst_2 : f32 to vector<2x1024xf32>
    %6 = arith.subf %4, %5 : vector<2x1024xf32>
    %c0_3 = arith.constant 0 : index
    %c0_4 = arith.constant 0 : index
    %7 = vector.load %arg2[%c0_3, %c0_4] : memref<2x1024xf32, #tpu.memory_space<vmem>>, vector<2x1024xf32>
    tpu.vector_store %arg2[%c0_3, %c0_4], %6 {strides = array<i32>} : memref<2x1024xf32, #tpu.memory_space<vmem>>, vector<2x1024xf32>,
    return
  }
  func.func @transform_0(%arg0: i32) -> (i32, i32) {
    %c0_i32 = arith.constant 0 : i32
    %c0_i32_0 = arith.constant 0 : i32
    return %arg0, %c0_i32 : i32, i32
  }
  func.func @transform_1(%arg0: i32) -> (i32, i32) {
    %c0_i32 = arith.constant 0 : i32
    %c0_i32_0 = arith.constant 0 : i32
    return %arg0, %c0_i32 : i32, i32
  }
}

</mosaic_0001>

<llo_original>
// kernel: pt_module_forward.1
$region0: #{pt_module_forward.1}
  #allocation0 [shape = 'u32[]', space=smem, size = 0x4, offset = 0x4, fixed_abs, tag = 'smem constant byte address 0x4 - core index']
  #allocation1 [shape = 'u32[144,128]{1,0:T(1,128)}', space=vmem, size = 0x12000, scoped, tag = 'internal scratch']
  %s0 = inlined_call_operand.vmem [shape: f32[2,1024], index: 0, kind: input, shape index: {}]
  %s1 = inlined_call_operand.vmem [shape: f32[2,1024], index: 1, kind: output, shape index: {}]
  %s2 = sld [smem:[#allocation0]]
  $region14: #{pt_module_forward.1} parent=0
    _
  %s4 = ssub.s32 1, %s2
  %s5 = scalar_select 0, %s4, %s2
  // Predicated region
  $region2: #{pt_module_forward.1} parent=0 // pred_check
    _
  $region3: #{pt_module_forward.1} parent=0 // pred_check_branch
    %7 = sbr.rel (0) target = $region5
  $region4: #{pt_module_forward.1} parent=0 // pred_region
    _
  $region5: #{pt_module_forward.1} parent=0 // pred_fallthru
    _
  %v8 = vld [vmem:[%s0] sm:$0xff]
  %v9 = vld [vmem:[%s0 + $0x8] sm:$0xff]
  %v10 = vadd.f32 %v8, 1.0
  %v11 = vadd.f32 %v9, 1.0
  %v12 = vmul.f32 %v10, 2.0
  %v13 = vmul.f32 %v11, 2.0
  %v14 = vsub.f32 %v12, 3.0
  %v15 = vsub.f32 %v13, 3.0
  %16 = vst [vmem:[%s1] sm:$0xff] %v14
  %17 = vst [vmem:[%s1 + $0x8] sm:$0xff] %v15
  // Predicated region
  $region6: #{pt_module_forward.1} parent=0 // pred_check
    _
  $region7: #{pt_module_forward.1} parent=0 // pred_check_branch
    %19 = sbr.rel (0) target = $region9
  $region8: #{pt_module_forward.1} parent=0 // pred_region
    _
  $region9: #{pt_module_forward.1} parent=0 // pred_fallthru
    _
  // Predicated region
  $region10: #{pt_module_forward.1} parent=0 // pred_check
    _
  $region11: #{pt_module_forward.1} parent=0 // pred_check_branch
    %21 = sbr.rel (0) target = $region13
  $region12: #{pt_module_forward.1} parent=0 // pred_region
    _
  $region13: #{pt_module_forward.1} parent=0 // pred_fallthru
    _

</llo_original>
